<compile_context>
chip_gen: v6e
topology: v6e:2x2x1
jax: 0.10.0
libtpu: 0.0.40
codegen_flags: <defaults>
</compile_context>

<pallas_src>
import functools

import jax
import jax.numpy as jnp
from jax.experimental import pallas as pl
from jax.experimental.pallas import tpu as pltpu

_LANES = 128
_SUBLANES = 8
_FOLD = 64                      # rows folded per partial tile -> 8 independent f32 accumulator vregs
_MAX_BLOCK_ROWS = 4096          # 4096 x 128 f32 = 2 MiB per input per grid step
_FAST_PATH_ELEMS = 1 << 20      # below this, fused XLA reduce beats pallas_call fixed overhead
_VMEM_LIMIT_BYTES = 32 * 1024 * 1024


def _cdiv(a: int, b: int) -> int:
    return -(-a // b)


def _round_up(x: int, m: int) -> int:
    return _cdiv(x, m) * m


# ----------------------------------- kernel ---------------------------------------

def _sqdiff_partial_kernel(x1_ref, x2_ref, out_ref, *, rows, block_rows, fold, ragged):
    """Partial sum of (x1 - x2)^2 over one (block_rows, 128) block, folded to (fold, 128).

    The fold is a sublane-axis reshape + sum over the leading axis: pure VPU elementwise adds
    (no XLU cross-lane reduce) with `fold` independent accumulator lanes so the dependent add
    chain is only block_rows / fold long.
    """
    x1 = x1_ref[...].astype(jnp.float32)     # upcast after load -> narrow dtypes stream narrow
    x2 = x2_ref[...].astype(jnp.float32)
    d = x1 - x2
    sq = d * d
    if ragged:
        # Only the last grid block is partial; rows >= `rows` hold stale VMEM data -> zero them.
        row_id = (pl.program_id(0) * block_rows
                  + jax.lax.broadcasted_iota(jnp.int32, (block_rows, _LANES), 0))
        sq = jnp.where(row_id < rows, sq, 0.0)
    out_ref[...] = jnp.sum(sq.reshape(block_rows // fold, fold, _LANES), axis=0)


# ---------------------------------- wrapper ----------------------------------------

def psnr_loss(img1, img2, *, max_pixel=1.0, force_pallas=False):
    """Equivalent of PSNRLoss(max_pixel)(img1, img2); inputs may be any (matching) shape."""
    if img1.shape != img2.shape:
        raise ValueError("Input images must have the same shape.")

    total = 1
    for s in img1.shape:
        total *= int(s)

    def _finalize(mse):
        mse_safe = jnp.where(mse == 0.0, jnp.float32(1.0), mse)   # guard log10(0) / div-by-0
        psnr_value = 20.0 * jnp.log10(jnp.float32(max_pixel) / jnp.sqrt(mse_safe))
        # torch: if mse == 0 -> tensor(0.0, float32); else -> -psnr
        # TODO(synk): torch's early return is a host-side Python branch on a device value; here
        # it is a traced jnp.where, numerically identical for the forward pass.
        return jnp.where(mse == 0.0, jnp.float32(0.0), -psnr_value)

    # Small-input fast path: pallas_call fixed overhead (several us) dwarfs the work; XLA's
    # fused elementwise+reduce is already at the HBM roofline for these sizes.
    if total < _FAST_PATH_ELEMS and not force_pallas:
        d = img1.astype(jnp.float32) - img2.astype(jnp.float32)
        return _finalize(jnp.mean(d * d))

    x1 = img1.reshape(-1)        # keep native dtype; the upcast happens inside the kernel
    x2 = img2.reshape(-1)

    rows = _cdiv(total, _LANES)
    tail = rows * _LANES - total
    if tail:
        # TODO(synk): sub-lane ragged tail (<128 elems) — zero-pad BOTH inputs so it adds 0.
        x1 = jnp.pad(x1, (0, tail))
        x2 = jnp.pad(x2, (0, tail))
    x1 = x1.reshape(rows, _LANES)
    x2 = x2.reshape(rows, _LANES)

    # Block sizing: minimize dead rows, align to the fold factor, cap at ~2 MiB f32 per step.
    fold = _FOLD if rows >= _FOLD else _SUBLANES
    n_blocks = _cdiv(rows, _MAX_BLOCK_ROWS)
    block_rows = _round_up(_cdiv(rows, n_blocks), fold)
    grid = _cdiv(rows, block_rows)
    ragged = (rows % block_rows) != 0        # only the last block can be partial

    kernel = functools.partial(_sqdiff_partial_kernel, rows=rows, block_rows=block_rows,
                               fold=fold, ragged=ragged)

    itemsize = jnp.dtype(img1.dtype).itemsize
    cost = pl.CostEstimate(
        flops=3 * grid * block_rows * _LANES,
        transcendentals=0,
        bytes_accessed=2 * total * itemsize + grid * fold * _LANES * 4,
    )

    partials = pl.pallas_call(
        kernel,
        out_shape=jax.ShapeDtypeStruct((grid, fold, _LANES), jnp.float32),
        grid=(grid,),
        in_specs=[
            pl.BlockSpec((block_rows, _LANES), lambda i: (i, 0)),
            pl.BlockSpec((block_rows, _LANES), lambda i: (i, 0)),
        ],
        # One lane-dense (fold, 128) partial per grid index -> no resident accumulator.
        out_specs=pl.BlockSpec((None, fold, _LANES), lambda i: (i, 0, 0)),
        compiler_params=pltpu.CompilerParams(
            dimension_semantics=("parallel",),      # independent blocks -> 2-TC shardable (v7x)
            vmem_limit_bytes=_VMEM_LIMIT_BYTES),    # double-buffered 2 MiB blocks fit v5e too
        cost_estimate=cost,
    )(x1, x2)

    # Tiny final reduce + PSNR math in the wrapper.
    mse = jnp.sum(partials, dtype=jnp.float32) / jnp.float32(total)
    return _finalize(mse)


if __name__ == "__main__":
    key = jax.random.PRNGKey(0)
    k1, k2 = jax.random.split(key)
    N, C, H, W = 2, 4, 16, 16
    img1 = jax.random.uniform(k1, (N, C, H, W), dtype=jnp.float32)
    img2 = jnp.clip(
        img1 + 0.05 * jax.random.normal(k2, (N, C, H, W), dtype=jnp.float32), 0.0, 1.0)

    # Exercise the Pallas kernel path explicitly (this small shape would otherwise take the
    # fused-jnp fast path), then also check the auto path.
    loss = psnr_loss(img1, img2, max_pixel=1.0, force_pallas=True)
    jax.block_until_ready(loss)
    loss_auto = psnr_loss(img1, img2, max_pixel=1.0)
    jax.block_until_ready(loss_auto)

    # Pure-jnp reference of the torch formula.
    mse_ref = jnp.mean((img1 - img2) ** 2)
    ref = jnp.where(mse_ref == 0.0, jnp.float32(0.0),
                    -(20.0 * jnp.log10(1.0 / jnp.sqrt(mse_ref))))
    assert jnp.allclose(loss, ref, rtol=1e-4, atol=1e-5), (float(loss), float(ref))
    assert jnp.allclose(loss_auto, ref, rtol=1e-4, atol=1e-5), (float(loss_auto), float(ref))

    print("KERNEL_OK")
</pallas_src>

<mosaic_0001>
module attributes {stable_mosaic.version = 11 : i64} {
  func.func @_sqdiff_partial_kernel(%arg0: i32, %arg1: memref<16x128xf32, #tpu.memory_space<vmem>>, %arg2: memref<16x128xf32, #tpu.memory_space<vmem>>, %arg3: memref<1x8x128xf32, #tpu.memory_space<vmem>>) attributes {dimension_semantics = [#tpu.dimension_semantics<parallel>], iteration_bounds = array<i64: 1>, scalar_prefetch = 0 : i64, scratch_operands = 0 : i64, tpu.core_type = #tpu.core_type<tc>, window_params = [{transform_indices = @transform_0, window_bounds = array<i64: 16, 128>}, {transform_indices = @transform_1, window_bounds = array<i64: 16, 128>}, {transform_indices = @transform_2, window_bounds = array<i64: 1, 8, 128>}]} {
    %c0 = arith.constant 0 : index
    %c0_0 = arith.constant 0 : index
    %0 = vector.load %arg1[%c0, %c0_0] : memref<16x128xf32, #tpu.memory_space<vmem>>, vector<16x128xf32>
    %c0_1 = arith.constant 0 : index
    %c0_2 = arith.constant 0 : index
    %1 = vector.load %arg2[%c0_1, %c0_2] : memref<16x128xf32, #tpu.memory_space<vmem>>, vector<16x128xf32>
    %2 = arith.subf %0, %1 : vector<16x128xf32>
    %3 = arith.mulf %2, %2 : vector<16x128xf32>
    %4 = vector.shape_cast %3 : vector<16x128xf32> to vector<2x8x128xf32>
    %cst = arith.constant dense<0.000000e+00> : vector<8x128xf32>
    %5 = vector.multi_reduction <add>, %4, %cst [0] : vector<2x8x128xf32> to vector<8x128xf32>
    %c0_3 = arith.constant 0 : index
    %c0_4 = arith.constant 0 : index
    %c0_5 = arith.constant 0 : index
    %6 = vector.load %arg3[%c0_3, %c0_4, %c0_5] : memref<1x8x128xf32, #tpu.memory_space<vmem>>, vector<1x8x128xf32>
    %7 = vector.shape_cast %6 : vector<1x8x128xf32> to vector<8x128xf32>
    %8 = vector.shape_cast %5 : vector<8x128xf32> to vector<1x8x128xf32>
    tpu.vector_store %arg3[%c0_3, %c0_4, %c0_5], %8 {strides = array<i32>} : memref<1x8x128xf32, #tpu.memory_space<vmem>>, vector<1x8x128xf32>,
    return
  }
  func.func @transform_0(%arg0: i32) -> (i32, i32) {
    %c0_i32 = arith.constant 0 : i32
    %c0_i32_0 = arith.constant 0 : i32
    return %arg0, %c0_i32 : i32, i32
  }
  func.func @transform_1(%arg0: i32) -> (i32, i32) {
    %c0_i32 = arith.constant 0 : i32
    %c0_i32_0 = arith.constant 0 : i32
    return %arg0, %c0_i32 : i32, i32
  }
  func.func @transform_2(%arg0: i32) -> (i32, i32, i32) {
    %c0_i32 = arith.constant 0 : i32
    %c0_i32_0 = arith.constant 0 : i32
    %c0_i32_1 = arith.constant 0 : i32
    return %arg0, %c0_i32, %c0_i32_0 : i32, i32, i32
  }
}

</mosaic_0001>

<llo_original>
// kernel: tpu_custom_call.1
$region0: #{tpu_custom_call.1}
  #allocation0 [shape = 'u32[]', space=smem, size = 0x4, offset = 0x4, fixed_abs, tag = 'smem constant byte address 0x4 - core index']
  #allocation1 [shape = 'u32[144,128]{1,0:T(1,128)}', space=vmem, size = 0x12000, scoped, tag = 'internal scratch']
  %s0 = inlined_call_operand.hbm [shape: f32[16,128], index: 0, kind: input, shape index: {}]
  %s1 = inlined_call_operand.hbm [shape: f32[16,128], index: 1, kind: input, shape index: {}]
  %s2 = inlined_call_operand.hbm [shape: f32[1,8,128], index: 2, kind: output, shape index: {}]
  %s3 = sld [smem:[#allocation0]]
  $region26: #{tpu_custom_call.1} parent=0
    _
  %s5 = ssub.s32 1, %s3
  %s6 = scalar_select 0, %s5, %s3
  $region1: #{tpu_custom_call.1} parent=0
    #allocation2 [shape = 'u8[8192]{0}', space=vmem, size = 0x2000, scoped, tag = 'input window, operand 0, single buffered']
    #allocation3 [shape = 's32[1]{0}', space=sflag, size = 0x4, scoped, tag = 'scoped memory for tpu_custom_call.1']
    #allocation4 [shape = 's32[1]{0}', space=sflag, size = 0x4, scoped, tag = 'scoped memory for tpu_custom_call.1']
    #allocation5 [shape = 'u8[8192]{0}', space=vmem, size = 0x2000, scoped, tag = 'input window, operand 1, single buffered']
    #allocation6 [shape = 's32[1]{0}', space=sflag, size = 0x4, scoped, tag = 'scoped memory for tpu_custom_call.1']
    #allocation7 [shape = 'u8[4096]{0}', space=vmem, size = 0x1000, scoped, tag = 'output window, operand 0, single buffered']
    %7 = vsyncpa [#allocation3], 0
    %8 = vsyncpa [#allocation6], 0
    %9 = vsyncpa [#allocation4], 0
    // Predicated region
    $region2: #{tpu_custom_call.1} parent=1 // pred_check
      _
    $region3: #{tpu_custom_call.1} parent=1 // pred_check_branch
      %11 = sbr.rel (0) target = $region5
    $region4: #{tpu_custom_call.1} parent=1 // pred_region
      %s13 = ssub.s32 256, 256
      %14 = vsyncadd [#allocation3], %s13
      %s15 = sshll.u32 [#allocation2], 4
      %s16 = int_to_ptr.vmem [resolvable:$true] %s15
      %21 = dma.hbm_to_vmem [thread:$0]  %s0, 256, %s16, [#allocation3], 128, 128, 8
    $region5: #{tpu_custom_call.1} parent=1 // pred_fallthru
      _
    // Predicated region
    $region6: #{tpu_custom_call.1} parent=1 // pred_check
      _
    $region7: #{tpu_custom_call.1} parent=1 // pred_check_branch
      %23 = sbr.rel (0) target = $region9
    $region8: #{tpu_custom_call.1} parent=1 // pred_region
      %s25 = ssub.s32 256, 256
      %26 = vsyncadd [#allocation6], %s25
      %s27 = sshll.u32 [#allocation5], 4
      %s28 = int_to_ptr.vmem [resolvable:$true] %s27
      %33 = dma.hbm_to_vmem [thread:$0]  %s1, 256, %s28, [#allocation6], 128, 128, 8
    $region9: #{tpu_custom_call.1} parent=1 // pred_fallthru
      _
    // Predicated region
    $region10: #{tpu_custom_call.1} parent=1 // pred_check
      _
    $region11: #{tpu_custom_call.1} parent=1 // pred_check_branch
      %35 = sbr.rel (0) target = $region13
    $region12: #{tpu_custom_call.1} parent=1 // pred_region
      %36 = dma.done [#allocation3], 256
    $region13: #{tpu_custom_call.1} parent=1 // pred_fallthru
      _
    // Predicated region
    $region14: #{tpu_custom_call.1} parent=1 // pred_check
      _
    $region15: #{tpu_custom_call.1} parent=1 // pred_check_branch
      %38 = sbr.rel (0) target = $region17
    $region16: #{tpu_custom_call.1} parent=1 // pred_region
      %39 = dma.done [#allocation6], 256
    $region17: #{tpu_custom_call.1} parent=1 // pred_fallthru
      _
    %v40 = vld [vmem:[#allocation2] sm:$0xff]
    %v41 = vld [vmem:[#allocation2 + $0x8] sm:$0xff]
    %v42 = vld [vmem:[#allocation5] sm:$0xff]
    %v43 = vld [vmem:[#allocation5 + $0x8] sm:$0xff]
    %v44 = vsub.f32 %v40, %v42
    %v45 = vsub.f32 %v41, %v43
    %v46 = vmul.f32 %v44, %v44
    %v47 = vmul.f32 %v45, %v45
    %v48 = vadd.f32 %v46, %v47
    %49 = vst [vmem:[#allocation7] sm:$0xff] %v48
    // Predicated region
    $region18: #{tpu_custom_call.1} parent=1 // pred_check
      _
    $region19: #{tpu_custom_call.1} parent=1 // pred_check_branch
      %51 = sbr.rel (0) target = $region21
    $region20: #{tpu_custom_call.1} parent=1 // pred_region
      %s53 = ssub.s32 128, 128
      %54 = vsyncadd [#allocation4], %s53
      %s56 = sshll.u32 [#allocation7], 4
      %s57 = int_to_ptr.vmem [resolvable:$true] %s56
      %59 = dma.vmem_to_hbm [thread:$0]  %s57, 128, %s2, [#allocation4]
    $region21: #{tpu_custom_call.1} parent=1 // pred_fallthru
      _
    // Predicated region
    $region22: #{tpu_custom_call.1} parent=1 // pred_check
      _
    $region23: #{tpu_custom_call.1} parent=1 // pred_check_branch
      %61 = sbr.rel (0) target = $region25
    $region24: #{tpu_custom_call.1} parent=1 // pred_region
      %62 = dma.done [#allocation4], 128
    $region25: #{tpu_custom_call.1} parent=1 // pred_fallthru
      _
    %63 = vsyncpa [#allocation3], 1
    %64 = vsyncpa [#allocation6], 1
    %65 = vsyncpa [#allocation4], 1

</llo_original>
